<compile_context>
chip_gen: v7x
topology: tpu7x:2x2x1
jax: 0.10.0
libtpu: 0.0.40
codegen_flags: <defaults>
</compile_context>

<pallas_src>
import functools
import math

import jax
import jax.numpy as jnp
from jax import lax
from jax.experimental import pallas as pl
from jax.experimental.pallas import tpu as pltpu

_LANE = 128


def _sublanes(dtype):
    # Packed sublane count per vreg for the native dtype.
    itemsize = jnp.dtype(dtype).itemsize
    return {4: 8, 2: 16, 1: 32}.get(itemsize, 8)


def _round_down_128(n):
    return max(_LANE, (n // _LANE) * _LANE)


def _readout_kernel_folded(x_ref, o_ref, *, red, inv_t, t_steps, chunk, n_chunks):
    # x_ref: (T, 1, SUB, tile) in native dtype; o_ref: (1, SUB, tile) out dtype.
    def _reduce_chunk(start):
        sl = pl.ds(start, chunk)

        def t_body(t, acc):
            v = x_ref[t, 0, :, sl].astype(jnp.float32)
            return jnp.maximum(acc, v) if red == "max" else acc + v

        acc = lax.fori_loop(1, t_steps, t_body,
                            x_ref[0, 0, :, sl].astype(jnp.float32))
        if red == "avg":
            acc = acc * inv_t
        o_ref[0, :, sl] = acc.astype(o_ref.dtype)

    if n_chunks == 1:
        _reduce_chunk(0)
    else:
        @pl.loop(0, n_chunks)
        def _(c):
            _reduce_chunk(pl.multiple_of(c * chunk, _LANE))


def _readout_kernel_flat(x_ref, o_ref, *, red, inv_t, t_steps):
    # Ragged fallback. x_ref: (T, tile) native dtype; o_ref: (1, tile).
    def t_body(t, acc):
        v = x_ref[pl.ds(t, 1), :].astype(jnp.float32)
        return jnp.maximum(acc, v) if red == "max" else acc + v

    acc = lax.fori_loop(1, t_steps, t_body,
                        x_ref[pl.ds(0, 1), :].astype(jnp.float32))
    if red == "avg":
        acc = acc * inv_t
    o_ref[...] = acc.astype(o_ref.dtype)


def read_out(x, mode="psp_avg"):
    """Pallas ReadOut forward: reduce the leading (time) axis of x."""
    if "max" in mode:
        red = "max"
    elif "avg" in mode:
        red = "avg"
    else:
        raise ValueError(f"unsupported ReadOut mode: {mode!r}")

    T = x.shape[0]
    if T == 0:
        raise ValueError("ReadOut requires at least one timestep")
    rest_shape = x.shape[1:]
    M = math.prod(rest_shape) if rest_shape else 1

    in_dtype = x.dtype
    itemsize = jnp.dtype(in_dtype).itemsize
    # Floating traces keep their dtype; integer/bool traces are reduced in f32
    # and returned as f32 (torch.mean on integer inputs is an error anyway).
    out_dtype = in_dtype if jnp.issubdtype(in_dtype, jnp.floating) else jnp.float32
    out_itemsize = jnp.dtype(out_dtype).itemsize
    inv_t = 1.0 / float(T)

    if M == 0:
        return jnp.zeros(rest_shape, out_dtype)

    x2 = x.reshape(T, M)  # free contiguous reshape, native dtype

    ce = pl.CostEstimate(flops=T * M, transcendentals=0,
                         bytes_accessed=T * M * itemsize + M * out_itemsize)
    cparams = pltpu.CompilerParams(dimension_semantics=("parallel",),
                                   vmem_limit_bytes=32 << 20)

    sub = _sublanes(in_dtype)
    granule = sub * _LANE

    if M % granule == 0:
        # ---- Fast path: exact (T, n_tiles, SUB, tile) fold, contiguous DMA.
        lanes_total = M // sub
        q = lanes_total // _LANE                     # 128-lane groups
        # Target ~2 MiB per grid step; SUB*itemsize == 32 B for all dtypes.
        tile_cap = _round_down_128((2 << 20) // (32 * T))
        if q >= 2:
            # Keep >= 2 grid steps so "parallel" can shard across v7x TCs.
            tile_cap = min(tile_cap, (q // 2) * _LANE)
        tile = _LANE
        for d in range(min(q, tile_cap // _LANE), 0, -1):
            if q % d == 0:
                tile = d * _LANE
                break
        n_tiles = lanes_total // tile
        # Compute chunk keeps the live f32 accumulator slab small (<=16 vregs)
        # while the DMA block stays large.
        chunk = 512 if tile % 512 == 0 else (256 if tile % 256 == 0 else _LANE)
        chunk = min(chunk, tile)
        n_chunks = tile // chunk

        x4 = x2.reshape(T, n_tiles, sub, tile)       # free contiguous reshape
        kernel = functools.partial(_readout_kernel_folded, red=red, inv_t=inv_t,
                                   t_steps=T, chunk=chunk, n_chunks=n_chunks)
        out = pl.pallas_call(
            kernel,
            out_shape=jax.ShapeDtypeStruct((n_tiles, sub, tile), out_dtype),
            grid=(n_tiles,),
            in_specs=[pl.BlockSpec((T, 1, sub, tile), lambda i: (0, i, 0, 0))],
            out_specs=pl.BlockSpec((1, sub, tile), lambda i: (i, 0, 0)),
            compiler_params=cparams,
            cost_estimate=ce,
        )(x4)
        out = out.reshape(M)
    else:
        # ---- Pad-free ragged fallback: partial final block is masked by
        # Pallas on writeback (no extra HBM pass for padding).
        m_ceil = -(-M // _LANE) * _LANE
        tile = max(_LANE,
                   min(2048, _round_down_128((1 << 20) // max(1, T * itemsize)),
                       m_ceil))
        kernel = functools.partial(_readout_kernel_flat, red=red, inv_t=inv_t,
                                   t_steps=T)
        out = pl.pallas_call(
            kernel,
            out_shape=jax.ShapeDtypeStruct((1, M), out_dtype),
            grid=(pl.cdiv(M, tile),),
            in_specs=[pl.BlockSpec((T, tile), lambda i: (0, i))],
            out_specs=pl.BlockSpec((1, tile), lambda i: (0, i)),
            compiler_params=cparams,
            cost_estimate=ce,
        )(x2)
        out = out.reshape(M)

    return out.reshape(rest_shape)


if __name__ == "__main__":
    key = jax.random.PRNGKey(0)
    k1, k2, k3 = jax.random.split(key, 3)

    # SNN-style input: [T, N, C, H, W] with time on dim 0.
    T, N, C, H, W = 8, 2, 4, 16, 16
    x = jax.random.normal(k1, (T, N, C, H, W), dtype=jnp.float32) * 1.5 + 0.2

    # Default mode ('psp_avg') -> mean over time.
    y_avg = read_out(x, mode="psp_avg")
    jax.block_until_ready(y_avg)
    ref_avg = jnp.mean(x, axis=0)
    assert y_avg.shape == ref_avg.shape and y_avg.dtype == ref_avg.dtype
    assert jnp.allclose(y_avg, ref_avg, atol=1e-5, rtol=1e-5), "avg mismatch"

    # 'max' mode -> max over time.
    y_max = read_out(x, mode="psp_max")
    jax.block_until_ready(y_max)
    assert jnp.allclose(y_max, jnp.max(x, axis=0), atol=1e-6, rtol=1e-6), \
        "max mismatch"

    # bf16 input stays bf16 end to end (no wrapper-side f32 up-cast pass).
    xb = (jax.random.normal(k3, (T, N, C, H, W), dtype=jnp.float32) * 0.5
          ).astype(jnp.bfloat16)
    y_b = read_out(xb, mode="psp_avg")
    jax.block_until_ready(y_b)
    assert y_b.dtype == jnp.bfloat16
    ref_b = jnp.mean(xb.astype(jnp.float32), axis=0)
    assert jnp.allclose(y_b.astype(jnp.float32), ref_b, atol=2e-2, rtol=2e-2), \
        "bf16 avg mismatch"

    # Ragged shape exercises the pad-free partial-block fallback path.
    x_r = jax.random.normal(k2, (4, 2, 3, 10, 10), dtype=jnp.float32)
    y_r = read_out(x_r, mode="psp_avg")
    jax.block_until_ready(y_r)
    assert jnp.allclose(y_r, jnp.mean(x_r, axis=0), atol=1e-5, rtol=1e-5), \
        "ragged avg mismatch"

    print("KERNEL_OK")
</pallas_src>

<mosaic_0001>
module attributes {stable_mosaic.version = 11 : i64} {
  func.func @_readout_kernel_folded(%arg0: i32, %arg1: memref<8x1x8x128xf32, #tpu.memory_space<vmem>>, %arg2: memref<1x8x128xf32, #tpu.memory_space<vmem>>) attributes {dimension_semantics = [#tpu.dimension_semantics<parallel>], iteration_bounds = array<i64: 2>, scalar_prefetch = 0 : i64, scratch_operands = 0 : i64, tpu.core_type = #tpu.core_type<tc>, window_params = [{transform_indices = @transform_0, window_bounds = array<i64: 8, 1, 8, 128>}, {transform_indices = @transform_1, window_bounds = array<i64: 1, 8, 128>}]} {
    %c0 = arith.constant 0 : index
    %c0_0 = arith.constant 0 : index
    %c0_1 = arith.constant 0 : index
    %c0_2 = arith.constant 0 : index
    %0 = vector.load %arg1[%c0, %c0_0, %c0_1, %c0_2] : memref<8x1x8x128xf32, #tpu.memory_space<vmem>>, vector<1x1x8x128xf32>
    %1 = vector.shape_cast %0 : vector<1x1x8x128xf32> to vector<8x128xf32>
    %c1_i32 = arith.constant 1 : i32
    %c7_i32 = arith.constant 7 : i32
    %2 = arith.addi %c1_i32, %c7_i32 : i32
    %c1_i32_3 = arith.constant 1 : i32
    %3 = scf.for %arg3 = %c1_i32 to %2 step %c1_i32_3 iter_args(%arg4 = %1) -> (vector<8x128xf32>)  : i32 {
      %9 = arith.index_cast %arg3 : i32 to index
      %c0_8 = arith.constant 0 : index
      %c0_9 = arith.constant 0 : index
      %c0_10 = arith.constant 0 : index
      %10 = vector.load %arg1[%9, %c0_8, %c0_9, %c0_10] : memref<8x1x8x128xf32, #tpu.memory_space<vmem>>, vector<1x1x8x128xf32>
      %11 = vector.shape_cast %10 : vector<1x1x8x128xf32> to vector<8x128xf32>
      %12 = arith.addf %arg4, %11 : vector<8x128xf32>
      scf.yield %12 : vector<8x128xf32>
    }
    %c7_i32_4 = arith.constant 7 : i32
    %cst = arith.constant 1.250000e-01 : f32
    %4 = vector.broadcast %cst : f32 to vector<8x128xf32>
    %5 = arith.mulf %3, %4 : vector<8x128xf32>
    %c0_5 = arith.constant 0 : index
    %c0_6 = arith.constant 0 : index
    %c0_7 = arith.constant 0 : index
    %6 = vector.load %arg2[%c0_5, %c0_6, %c0_7] : memref<1x8x128xf32, #tpu.memory_space<vmem>>, vector<1x8x128xf32>
    %7 = vector.shape_cast %6 : vector<1x8x128xf32> to vector<8x128xf32>
    %8 = vector.shape_cast %5 : vector<8x128xf32> to vector<1x8x128xf32>
    tpu.vector_store %arg2[%c0_5, %c0_6, %c0_7], %8 {strides = array<i32>} : memref<1x8x128xf32, #tpu.memory_space<vmem>>, vector<1x8x128xf32>,
    return
  }
  func.func @transform_0(%arg0: i32) -> (i32, i32, i32, i32) {
    %c0_i32 = arith.constant 0 : i32
    %c0_i32_0 = arith.constant 0 : i32
    %c0_i32_1 = arith.constant 0 : i32
    %c0_i32_2 = arith.constant 0 : i32
    return %c0_i32, %arg0, %c0_i32_0, %c0_i32_1 : i32, i32, i32, i32
  }
  func.func @transform_1(%arg0: i32) -> (i32, i32, i32) {
    %c0_i32 = arith.constant 0 : i32
    %c0_i32_0 = arith.constant 0 : i32
    %c0_i32_1 = arith.constant 0 : i32
    return %arg0, %c0_i32, %c0_i32_0 : i32, i32, i32
  }
}

</mosaic_0001>

<llo_original>
// kernel: tpu_custom_call.1
$region0: #{tpu_custom_call.1}
  #allocation0 [shape = 'u32[]', space=smem, size = 0x4, offset = 0x4, fixed_abs, tag = 'smem constant byte address 0x4 - core index']
  #allocation1 [shape = 'u32[144,128]{1,0:T(1,128)}', space=vmem, size = 0x12000, scoped, tag = 'internal scratch']
  %s0 = inlined_call_operand.hbm [shape: f32[8,2,8,128], index: 0, kind: input, shape index: {}]
  %s1 = inlined_call_operand.hbm [shape: f32[2,8,128], index: 1, kind: output, shape index: {}]
  %s2 = sld [smem:[#allocation0]]
  $region48: #{tpu_custom_call.1} parent=0
    _
  %s4 = ssub.s32 1, %s2
  %s5 = scalar_select 0, %s4, %s2
  $region1: #{tpu_custom_call.1} parent=0
    #allocation2 [shape = 'u8[65536]{0}', space=vmem, size = 0x10000, scoped, tag = 'input window, operand 0']
    #allocation3 [shape = 's32[2]{0}', space=sflag, size = 0x8, scoped, tag = 'scoped memory for tpu_custom_call.1']
    #allocation4 [shape = 's32[2]{0}', space=sflag, size = 0x8, scoped, tag = 'scoped memory for tpu_custom_call.1']
    #allocation5 [shape = 'u8[8192]{0}', space=vmem, size = 0x2000, scoped, tag = 'output window, operand 0']
    %6 = vsyncpa [#allocation3], 0
    %s7 = scalar_lea.sflag [#allocation3], 1
    %8 = vsyncpa %s7, 0
    %9 = vsyncpa [#allocation4], 0
    %s10 = scalar_lea.sflag [#allocation4], 1
    %11 = vsyncpa %s10, 0
    loop: start=0, step=1, limit=4
    $region2: #{tpu_custom_call.1} parent=1 // loop_pre_header
      _
    $region3: #{tpu_custom_call.1} parent=1 // loop_header
      %s13 = sphi 0, %s17
      %p14 = scmp.ge.s32.totalorder %s13, 4
      %s23 = sphi 0, %s25
      %s26 = sphi 0, %s23
      %s27 = sphi 0, %s26
      %s43 = sphi 0, %s27
      %s49 = sphi 0, %s51
      %s52 = sphi 0, %s49
      %s53 = sphi 0, %s52
      %s69 = sphi 0, %s53
    $region4: #{tpu_custom_call.1} parent=1 // loop_header_branch
      %16 = sbr.rel (%p14) target = $region8
    $region5: #{tpu_custom_call.1} parent=1 // loop_body
      %s18 = ssub.s32 %s13, 1
      %s19 = ssub.s32 %s13, 2
      %s20 = sadd.s32 %s13, 1
      %s21 = ssub.s32 %s13, %s20
      %p22 = scmp.eq.s32.totalorder %s21, 0
      %s24 = sadd.s32 %s23, 1
      %s25 = scalar_select %p22, %s23, %s24
      %p28 = pneg %p22
      %p29 = scmp.eq.s32.totalorder %s13, 1
      %p30 = por %p28, %p29
      %p31 = scmp.ne.s32.totalorder %s23, %s26
      %p32 = scmp.eq.s32.totalorder %s13, 0
      %p33 = por %p31, %p32
      %p34 = scmp.ne.s32.totalorder %s23, %s26
      %p35 = scmp.eq.s32.totalorder %s18, 1
      %p36 = por %p34, %p35
      %p37 = scmp.ne.s32.totalorder %s26, %s27
      %p38 = scmp.eq.s32.totalorder %s18, 0
      %p39 = por %p37, %p38
      %p40 = scmp.ne.s32.totalorder %s26, %s27
      %p41 = scmp.eq.s32.totalorder %s19, 1
      %p42 = por %p40, %p41
      %p44 = scmp.ne.s32.totalorder %s27, %s43
      %p45 = scmp.eq.s32.totalorder %s19, 0
      %p46 = por %p44, %p45
      %s47 = ssub.s32 %s13, %s20
      %p48 = scmp.eq.s32.totalorder %s47, 0
      %s50 = sadd.s32 %s49, 1
      %s51 = scalar_select %p48, %s49, %s50
      %p54 = pneg %p48
      %p55 = scmp.eq.s32.totalorder %s13, 1
      %p56 = por %p54, %p55
      %p57 = scmp.ne.s32.totalorder %s49, %s52
      %p58 = scmp.eq.s32.totalorder %s13, 0
      %p59 = por %p57, %p58
      %p60 = scmp.ne.s32.totalorder %s49, %s52
      %p61 = scmp.eq.s32.totalorder %s18, 1
      %p62 = por %p60, %p61
      %p63 = scmp.ne.s32.totalorder %s52, %s53
      %p64 = scmp.eq.s32.totalorder %s18, 0
      %p65 = por %p63, %p64
      %p66 = scmp.ne.s32.totalorder %s52, %s53
      %p67 = scmp.eq.s32.totalorder %s19, 1
      %p68 = por %p66, %p67
      %p70 = scmp.ne.s32.totalorder %s53, %s69
      %p71 = scmp.eq.s32.totalorder %s19, 0
      %p72 = por %p70, %p71
      %p73 = scmp.le.s32.totalorder 1, %s13
      %p74 = scmp.lt.s32.totalorder %s13, 3
      %p75 = pnand %p73, %p74
      %p76 = pneg %p75
      // Predicated region
      $region9: #{tpu_custom_call.1} parent=5 // pred_check
        _
      $region10: #{tpu_custom_call.1} parent=5 // pred_check_branch
        %78 = sbr.rel (%p75) target = $region12
      $region11: #{tpu_custom_call.1} parent=5 // pred_region
        %s79 = ssub.s32 %s13, 1
      $region12: #{tpu_custom_call.1} parent=5 // pred_fallthru
        _
      %p80 = scmp.lt.s32.totalorder %s13, 2
      // Predicated region
      $region13: #{tpu_custom_call.1} parent=5 // pred_check
        %p81 = pneg %p80
      $region14: #{tpu_custom_call.1} parent=5 // pred_check_branch
        %83 = sbr.rel (%p81) target = $region16
      $region15: #{tpu_custom_call.1} parent=5 // pred_region
        // Predicated region
        $region17: #{tpu_custom_call.1} parent=15 // pred_check
          %p84 = pneg %p33
        $region18: #{tpu_custom_call.1} parent=15 // pred_check_branch
          %86 = sbr.rel (%p84) target = $region20
        $region19: #{tpu_custom_call.1} parent=15 // pred_region
          %s87 = sand.u32 %s23, 1
          %s88 = scalar_lea.sflag [#allocation3], %s87
          %s89 = sand.u32 %s23, 1
          %s90 = smul.addr %s89, 64
          %s91 = scalar_lea.vmem [#allocation2], %s90
          %s93 = ssub.s32 1024, 1024
          %94 = vsyncadd %s88, %s93
          %s95 = smul.addr %s13, 128
          %s96 = scalar_lea.hbm %s0, %s95
          %s97 = sshll.u32 %s91, 4
          %s98 = int_to_ptr.vmem [resolvable:$true] %s97
          %103 = dma.hbm_to_vmem [thread:$0]  %s96, 1024, %s98, %s88, 256, 128, 8
        $region20: #{tpu_custom_call.1} parent=15 // pred_fallthru
          _
      $region16: #{tpu_custom_call.1} parent=5 // pred_fallthru
        _
      %p104 = scmp.le.s32.totalorder 1, %s13
      %p105 = scmp.lt.s32.totalorder %s13, 3
      %p106 = pnand %p104, %p105
      %p107 = pneg %p106
      // Predicated region
      $region21: #{tpu_custom_call.1} parent=5 // pred_check
        _
      $region22: #{tpu_custom_call.1} parent=5 // pred_check_branch
        %109 = sbr.rel (%p106) target = $region24
      $region23: #{tpu_custom_call.1} parent=5 // pred_region
        %s110 = ssub.s32 %s13, 1
        %s111 = sand.u32 %s26, 1
        %s112 = scalar_lea.sflag [#allocation3], %s111
        %s113 = sand.u32 %s26, 1
        %s114 = smul.addr %s113, 64
        %s115 = scalar_lea.vmem [#allocation2], %s114
        // Predicated region
        $region25: #{tpu_custom_call.1} parent=23 // pred_check
          %p116 = pneg %p39
        $region26: #{tpu_custom_call.1} parent=23 // pred_check_branch
          %118 = sbr.rel (%p116) target = $region28
        $region27: #{tpu_custom_call.1} parent=23 // pred_region
          %119 = dma.done %s112, 1024
        $region28: #{tpu_custom_call.1} parent=23 // pred_fallthru
          _
        %s120 = sand.u32 %s26, 1
        %s121 = scalar_lea.sflag [#allocation3], %s120
        %s122 = sand.u32 %s26, 1
        %s123 = smul.addr %s122, 64
        %s124 = scalar_lea.vmem [#allocation2], %s123
        %p125 = pneg %p39
        %p126 = pneg %p36
        %p127 = pneg %p65
        %p128 = pneg %p62
        %s129 = sand.u32 %s52, 1
        %s130 = scalar_lea.sflag [#allocation4], %s129
        %s131 = sand.u32 %s52, 1
        %s132 = smul.addr %s131, 8
        %s133 = scalar_lea.vmem [#allocation5], %s132
        %v134 = vld [vmem:[%s115] sm:$0xff]
        loop: start=1, step=1, limit=8
        $region29: #{tpu_custom_call.1} parent=23 // loop_pre_header
          _
        $region30: #{tpu_custom_call.1} parent=23 // loop_header
          %s136 = sphi 1, %s140
          %p137 = scmp.ge.s32.totalorder %s136, 8
          %v141 = vphi %v134, %v145
        $region31: #{tpu_custom_call.1} parent=23 // loop_header_branch
          %139 = sbr.rel (%p137) target = $region35
        $region32: #{tpu_custom_call.1} parent=23 // loop_body
          %s142 = smul.u32 %s136, 8
          %s143 = scalar_lea.vmem %s115, %s142 [#allocation2]
          %v144 = vld [vmem:[%s143] sm:$0xff]
          %v145 = vadd.f32 %v141, %v144
        $region33: #{tpu_custom_call.1} parent=23 // loop_footer
          %s140 = sadd.s32 1, %s136
        $region34: #{tpu_custom_call.1} parent=23 // loop_footer_branch
          %135 = sbr.rel target = $region30
        $region35: #{tpu_custom_call.1} parent=23 // loop_exit
          _
        %v146 = vmul.f32 %v141, 0.125
        %147 = vst [vmem:[%s133] sm:$0xff] %v146
        %s148 = sand.u32 %s52, 1
        %s149 = scalar_lea.sflag [#allocation4], %s148
        %s150 = sand.u32 %s52, 1
        %s151 = smul.addr %s150, 8
        %s152 = scalar_lea.vmem [#allocation5], %s151
        // Predicated region
        $region36: #{tpu_custom_call.1} parent=23 // pred_check
          %p153 = pneg %p62
        $region37: #{tpu_custom_call.1} parent=23 // pred_check_branch
          %155 = sbr.rel (%p153) target = $region39
        $region38: #{tpu_custom_call.1} parent=23 // pred_region
          %s157 = ssub.s32 128, 128
          %158 = vsyncadd %s149, %s157
          %s159 = smul.addr %s18, 128
          %s160 = scalar_lea.hbm %s1, %s159
          %s162 = sshll.u32 %s152, 4
          %s163 = int_to_ptr.vmem [resolvable:$true] %s162
          %165 = dma.vmem_to_hbm [thread:$0]  %s163, 128, %s160, %s149
        $region39: #{tpu_custom_call.1} parent=23 // pred_fallthru
          _
      $region24: #{tpu_custom_call.1} parent=5 // pred_fallthru
        _
      %p166 = scmp.le.s32.totalorder 2, %s13
      // Predicated region
      $region40: #{tpu_custom_call.1} parent=5 // pred_check
        %p167 = pneg %p166
      $region41: #{tpu_custom_call.1} parent=5 // pred_check_branch
        %169 = sbr.rel (%p167) target = $region43
      $region42: #{tpu_custom_call.1} parent=5 // pred_region
        %s170 = ssub.s32 %s13, 2
        // Predicated region
        $region44: #{tpu_custom_call.1} parent=42 // pred_check
          %p171 = pneg %p68
        $region45: #{tpu_custom_call.1} parent=42 // pred_check_branch
          %173 = sbr.rel (%p171) target = $region47
        $region46: #{tpu_custom_call.1} parent=42 // pred_region
          %s174 = sand.u32 %s53, 1
          %s175 = scalar_lea.sflag [#allocation4], %s174
          %s176 = sand.u32 %s53, 1
          %s177 = smul.addr %s176, 8
          %s178 = scalar_lea.vmem [#allocation5], %s177
          %179 = dma.done %s175, 128
        $region47: #{tpu_custom_call.1} parent=42 // pred_fallthru
          _
      $region43: #{tpu_custom_call.1} parent=5 // pred_fallthru
        _
    $region6: #{tpu_custom_call.1} parent=1 // loop_footer
      %s17 = sadd.s32 1, %s13
    $region7: #{tpu_custom_call.1} parent=1 // loop_footer_branch
      %12 = sbr.rel target = $region3
    $region8: #{tpu_custom_call.1} parent=1 // loop_exit
      _
    %180 = vsyncpa [#allocation3], 1
    %s181 = scalar_lea.sflag [#allocation3], 1
    %182 = vsyncpa %s181, 1
    %183 = vsyncpa [#allocation4], 1
    %s184 = scalar_lea.sflag [#allocation4], 1
    %185 = vsyncpa %s184, 1

</llo_original>
